<compile_context>
chip_gen: v7x
topology: tpu7x:2x2x1
jax: 0.10.0
libtpu: 0.0.40
codegen_flags: <defaults>
</compile_context>

<pallas_src>
import math

import jax
import jax.numpy as jnp
from jax.experimental import pallas as pl
from jax.experimental.pallas import tpu as pltpu


def _round_up(x, m):
    return ((x + m - 1) // m) * m


def _cdiv(a, b):
    return (a + b - 1) // b


_FALLBACK_VMEM_CAP = 64 * 1024 * 1024  # v7x per-TC; conservative for v5e/v6e (128 MiB)


def _vmem_capacity_bytes():
    try:
        cap = int(pltpu.get_tpu_info().vmem_capacity_bytes)
        if cap > 0:
            return cap
    except Exception:
        pass
    return _FALLBACK_VMEM_CAP


# ----------------------------------------------------------------------------
# Kernels
# ----------------------------------------------------------------------------
def _make_resident_kernel(num_layers):
    """Small-model path: grid = (batch_tiles,).  All layers' fused weights are
    VMEM-resident; layers are unrolled in-kernel (no per-layer grid overhead,
    no per-batch-tile weight re-DMA)."""

    def kernel(x_ref, w_ref, b_ref, o_ref):
        Sp = x_ref.shape[1]
        x = x_ref[...].astype(jnp.float32)
        for l in range(num_layers):                       # static unroll (L is small)
            w = w_ref[l]                                  # (Sp, 3Sp), weights' native dtype
            y = jnp.dot(x.astype(w.dtype), w,
                        preferred_element_type=jnp.float32)
            y = y + b_ref[l].astype(jnp.float32)          # (1, 3Sp) broadcast
            nl = jnp.tanh(y[:, :Sp])                      # EUP
            lin = y[:, Sp:2 * Sp]
            gate = jax.nn.sigmoid(y[:, 2 * Sp:])          # EUP
            x = lin + gate * (nl - lin)                   # == gate*nl + (1-gate)*lin
        o_ref[...] = x.astype(o_ref.dtype)

    return kernel


def _highway_kernel_streamed(x_ref, w_ref, b_ref, o_ref, x_sc):
    """Grid = (batch_tiles, L); batch "parallel", layer "arbitrary".
    x_sc keeps the running activation (f32) resident across layers; layer l+1's
    fused weights are prefetched under layer l's compute."""
    l = pl.program_id(1)
    last = pl.num_programs(1) - 1
    Sp = x_sc.shape[1]

    @pl.when(l == 0)
    def _():
        x_sc[...] = x_ref[...].astype(jnp.float32)

    w = w_ref[...]
    y = jnp.dot(x_sc[...].astype(w.dtype), w, preferred_element_type=jnp.float32)
    y = y + b_ref[...].astype(jnp.float32)

    nl = jnp.tanh(y[:, :Sp])
    lin = y[:, Sp:2 * Sp]
    gate = jax.nn.sigmoid(y[:, 2 * Sp:])
    new_x = lin + gate * (nl - lin)

    @pl.when(l < last)              # skip the dead scratch store on the last layer
    def _():
        x_sc[...] = new_x

    @pl.when(l == last)
    def _():
        o_ref[...] = new_x.astype(o_ref.dtype)


def _highway_kernel_ktiled(x_ref, w_ref, b_ref, o_ref, x_sc, acc_sc):
    """Grid = (batch_tiles, L, K_tiles).  Weight blocks are (tk, 3Sp) so the
    double-buffered weight stream fits v7x's 64 MiB VMEM for large Sp.  The
    (tb, 3Sp) f32 accumulator is finalized (bias + tanh/sigmoid/blend) only on
    the last K step of each layer."""
    l = pl.program_id(1)
    k = pl.program_id(2)
    last_l = pl.num_programs(1) - 1
    last_k = pl.num_programs(2) - 1
    Sp = x_sc.shape[1]
    tk = w_ref.shape[0]

    @pl.when(jnp.logical_and(l == 0, k == 0))
    def _():
        x_sc[...] = x_ref[...].astype(jnp.float32)

    @pl.when(k == 0)
    def _():
        acc_sc[...] = jnp.zeros_like(acc_sc)

    w = w_ref[...]
    off = pl.multiple_of(k * tk, 128)
    x_blk = x_sc[:, pl.ds(off, tk)].astype(w.dtype)
    acc_sc[...] += jnp.dot(x_blk, w, preferred_element_type=jnp.float32)

    @pl.when(k == last_k)
    def _():
        y = acc_sc[...] + b_ref[...].astype(jnp.float32)
        nl = jnp.tanh(y[:, :Sp])
        lin = y[:, Sp:2 * Sp]
        gate = jax.nn.sigmoid(y[:, 2 * Sp:])
        new_x = lin + gate * (nl - lin)

        @pl.when(l < last_l)
        def _():
            x_sc[...] = new_x

        @pl.when(l == last_l)
        def _():
            o_ref[...] = new_x.astype(o_ref.dtype)


# ----------------------------------------------------------------------------
# Parameter packing (one-time, NOT per forward call)
# ----------------------------------------------------------------------------
def prepare_highway_params(params, pad_to=128, dtype=None):
    """Pack PyTorch-layout params (W: [out, in], b: [out]) into fused,
    pre-transposed, feature-padded arrays:
        packed_w : [L, Sp, 3*Sp]   columns 0:Sp = Wn.T, Sp:2Sp = Wl.T, 2Sp:3Sp = Wg.T
        packed_b : [L, 1, 3*Sp]
    `dtype=jnp.bfloat16` is recommended: it halves weight HBM/VMEM traffic and
    feeds the MXU natively.  Zero feature-padding is exact (padded lanes stay 0)."""
    S = params[0]["wn"].shape[0]
    Sp = _round_up(S, pad_to)
    out_dtype = jnp.dtype(dtype) if dtype is not None else jnp.dtype(params[0]["wn"].dtype)

    def padw(w):                       # [out, in] -> transposed + padded [Sp, Sp]
        return jnp.zeros((Sp, Sp), out_dtype).at[:S, :S].set(w.T.astype(out_dtype))

    def padb(b):
        return jnp.zeros((Sp,), out_dtype).at[:S].set(b.astype(out_dtype))

    ws, bs = [], []
    for p in params:
        ws.append(jnp.concatenate([padw(p["wn"]), padw(p["wl"]), padw(p["wg"])], axis=1))
        bs.append(jnp.concatenate([padb(p["bn"]), padb(p["bl"]), padb(p["bg"])])[None, :])
    packed_w = jnp.stack(ws, axis=0)   # [L, Sp, 3*Sp]
    packed_b = jnp.stack(bs, axis=0)   # [L, 1, 3*Sp]
    return packed_w, packed_b, S, Sp


# ----------------------------------------------------------------------------
# Forward
# ----------------------------------------------------------------------------
def highway_forward(x, packed_w, packed_b, size, size_padded, *,
                    block_b=None, path=None, k_tile=None, weight_buffers=2,
                    vmem_limit_bytes=None, interpret=False):
    """x: [B, size].  packed_w/packed_b from prepare_highway_params."""
    B, S = x.shape
    assert S == size
    L, Sp, threeSp = packed_w.shape
    assert Sp == size_padded and threeSp == 3 * Sp

    w_bytes = jnp.dtype(packed_w.dtype).itemsize
    x_bytes = jnp.dtype(x.dtype).itemsize
    o_bytes = x_bytes

    # Native sublane packing for the batch tile: 8 (f32) / 16 (bf16) / 32 (int8/fp8).
    sub = max(8, 32 // x_bytes)
    Bp0 = _round_up(B, sub)

    vmem_cap = _vmem_capacity_bytes()
    budget = int(vmem_cap * 0.85)           # leave headroom for Mosaic internals
    headroom = 2 * 1024 * 1024

    # ---- path selection --------------------------------------------------
    resident_weight_bytes = 2 * L * Sp * 3 * Sp * w_bytes   # (double-buffer safe estimate)
    if path is None:
        path = ("resident"
                if (Sp <= 512 and resident_weight_bytes <= budget // 2)
                else "streamed")

    if block_b is None:
        block_b = 512            # v6e/v7x roofline-friendly; v5e is compute-bound earlier
    block_b = max(sub, _round_up(block_b, sub))

    # ---- per-row / weight-buffer VMEM footprint ---------------------------
    if path == "resident":
        tk = Sp
        weight_buf = resident_weight_bytes
        bias_buf = 2 * L * 8 * 3 * Sp * w_bytes
        per_row = (2 * Sp * x_bytes + 2 * Sp * o_bytes   # in/out tiles (double-buffered)
                   + 4 * Sp                              # running f32 activation
                   + 28 * Sp)                            # f32 y + nl/lin/gate/new_x temps
    else:
        def wbuf(tk_):
            return weight_buffers * tk_ * 3 * Sp * w_bytes

        if k_tile is not None:
            assert k_tile % 128 == 0 and Sp % k_tile == 0
            tk = k_tile
        elif wbuf(Sp) <= budget // 2:
            tk = Sp                                       # no K-tiling needed
        else:                                             # v7x / huge Sp: K-tile the weights
            tk = 128
            d = Sp // 128
            for cand in range(d, 0, -1):
                if d % cand == 0 and wbuf(cand * 128) <= budget // 2:
                    tk = cand * 128
                    break
        weight_buf = wbuf(tk)
        bias_buf = 2 * 8 * 3 * Sp * w_bytes
        per_row = (2 * Sp * x_bytes + 2 * Sp * o_bytes
                   + 4 * Sp                              # x_sc (f32 scratch)
                   + 28 * Sp)                            # f32 y + temps
        if tk != Sp:
            per_row += 12 * Sp                           # f32 (tb, 3Sp) accumulator scratch

    # ---- batch tile ------------------------------------------------------
    avail = budget - weight_buf - bias_buf - headroom
    tb_cap = max(sub, (max(avail, 0) // max(per_row, 1)) // sub * sub)
    tb = min(block_b, Bp0, tb_cap)
    # v7x megacore: large batches should produce >= 2 batch tiles so both
    # TensorCores get work; small batches keep one tile (no duplicated weight DMA).
    if Bp0 >= 512 and Bp0 // tb < 2:
        tb = max(sub, _round_up(_cdiv(Bp0, 2), sub))
    Bp = _round_up(Bp0, tb)

    if vmem_limit_bytes is None:
        est = weight_buf + bias_buf + tb * per_row + headroom
        vmem_limit_bytes = int(min(vmem_cap, max(est, 32 * 1024 * 1024)))

    # ---- pad input (lane-dense features, sublane-dense batch) -------------
    xp = jnp.zeros((Bp, Sp), x.dtype).at[:B, :S].set(x)

    # ---- build the pallas_call --------------------------------------------
    if path == "resident":
        kernel = _make_resident_kernel(L)
        grid = (Bp // tb,)
        in_specs = [
            pl.BlockSpec((tb, Sp), lambda b: (b, 0)),
            pl.BlockSpec((L, Sp, 3 * Sp), lambda b: (0, 0, 0)),   # resident for whole call
            pl.BlockSpec((L, 1, 3 * Sp), lambda b: (0, 0, 0)),
        ]
        out_specs = pl.BlockSpec((tb, Sp), lambda b: (b, 0))
        scratch_shapes = []
        dim_sem = ("parallel",)
    elif tk == Sp:
        kernel = _highway_kernel_streamed
        grid = (Bp // tb, L)
        if weight_buffers != 2:
            w_spec = pl.BlockSpec((None, Sp, 3 * Sp), lambda b, l: (l, 0, 0),
                                  pipeline_mode=pl.Buffered(weight_buffers))
        else:
            w_spec = pl.BlockSpec((None, Sp, 3 * Sp), lambda b, l: (l, 0, 0))
        in_specs = [
            pl.BlockSpec((tb, Sp), lambda b, l: (b, 0)),          # fetched once per batch tile
            w_spec,                                               # streamed per layer
            pl.BlockSpec((None, 1, 3 * Sp), lambda b, l: (l, 0, 0)),
        ]
        out_specs = pl.BlockSpec((tb, Sp), lambda b, l: (b, 0))
        scratch_shapes = [pltpu.VMEM((tb, Sp), jnp.float32)]
        dim_sem = ("parallel", "arbitrary")
    else:
        kernel = _highway_kernel_ktiled
        grid = (Bp // tb, L, Sp // tk)
        in_specs = [
            pl.BlockSpec((tb, Sp), lambda b, l, k: (b, 0)),
            pl.BlockSpec((None, tk, 3 * Sp), lambda b, l, k: (l, k, 0)),
            pl.BlockSpec((None, 1, 3 * Sp), lambda b, l, k: (l, 0, 0)),
        ]
        out_specs = pl.BlockSpec((tb, Sp), lambda b, l, k: (b, 0))
        scratch_shapes = [pltpu.VMEM((tb, Sp), jnp.float32),
                          pltpu.VMEM((tb, 3 * Sp), jnp.float32)]
        dim_sem = ("parallel", "arbitrary", "arbitrary")

    out = pl.pallas_call(
        kernel,
        out_shape=jax.ShapeDtypeStruct((Bp, Sp), x.dtype),
        grid_spec=pltpu.PrefetchScalarGridSpec(
            num_scalar_prefetch=0,
            grid=grid,
            in_specs=in_specs,
            out_specs=out_specs,
            scratch_shapes=scratch_shapes,
        ),
        compiler_params=pltpu.CompilerParams(
            dimension_semantics=dim_sem,
            vmem_limit_bytes=vmem_limit_bytes,
        ),
        interpret=interpret,
    )(xp, packed_w, packed_b)

    return out[:B, :S]


# ----------------------------------------------------------------------------
# Init + reference
# ----------------------------------------------------------------------------
def init_highway_params(key, size, num_layers, dtype=jnp.float32):
    """nn.Linear default init: U(-1/sqrt(size), 1/sqrt(size)); PyTorch layout."""
    bound = 1.0 / math.sqrt(size)
    params = []
    for _ in range(num_layers):
        keys = jax.random.split(key, 7)
        key = keys[0]
        params.append({
            "wn": jax.random.uniform(keys[1], (size, size), dtype, -bound, bound),
            "bn": jax.random.uniform(keys[2], (size,), dtype, -bound, bound),
            "wl": jax.random.uniform(keys[3], (size, size), dtype, -bound, bound),
            "bl": jax.random.uniform(keys[4], (size,), dtype, -bound, bound),
            "wg": jax.random.uniform(keys[5], (size, size), dtype, -bound, bound),
            "bg": jax.random.uniform(keys[6], (size,), dtype, -bound, bound),
        })
    return params


def highway_reference(x, params, weight_dtype=None):
    """Pure-JAX reference of the PyTorch forward pass.  If weight_dtype is given
    (e.g. bf16), weights/biases and the matmul inputs are cast the same way the
    kernel does (f32 accumulation), so it matches the packed-weight kernel."""
    for p in params:
        if weight_dtype is None:
            nonlinear = jnp.tanh(x @ p["wn"].T + p["bn"])
            gate = jax.nn.sigmoid(x @ p["wg"].T + p["bg"])
            linear = x @ p["wl"].T + p["bl"]
        else:
            dt = weight_dtype
            xw = x.astype(dt)
            nonlinear = jnp.tanh(
                jnp.dot(xw, p["wn"].T.astype(dt), preferred_element_type=jnp.float32)
                + p["bn"].astype(dt).astype(jnp.float32))
            gate = jax.nn.sigmoid(
                jnp.dot(xw, p["wg"].T.astype(dt), preferred_element_type=jnp.float32)
                + p["bg"].astype(dt).astype(jnp.float32))
            linear = (
                jnp.dot(xw, p["wl"].T.astype(dt), preferred_element_type=jnp.float32)
                + p["bl"].astype(dt).astype(jnp.float32))
        x = gate * nonlinear + (1.0 - gate) * linear
    return x


if __name__ == "__main__":
    key = jax.random.PRNGKey(0)

    # ---- Test 1: tiny f32 model -> "resident" path (weights VMEM-resident) ----
    B, SIZE, NUM_LAYERS = 8, 32, 2
    kx, kp, key = jax.random.split(key, 3)
    x = jax.random.normal(kx, (B, SIZE), dtype=jnp.float32)
    params = init_highway_params(kp, SIZE, NUM_LAYERS)
    packed_w, packed_b, S, Sp = prepare_highway_params(params)          # f32 packing
    out = jax.block_until_ready(highway_forward(x, packed_w, packed_b, S, Sp))
    ref = highway_reference(x, params)
    assert out.shape == (B, SIZE)
    err1 = float(jnp.max(jnp.abs(out - ref)))
    assert err1 < 1e-4, f"resident path mismatch vs reference, max abs err {err1}"

    # ---- Test 2: bf16-packed weights, layer-streamed path ----
    B2, SIZE2, LAYERS2 = 48, 160, 3
    kx2, kp2, key = jax.random.split(key, 3)
    x2 = jax.random.normal(kx2, (B2, SIZE2), dtype=jnp.float32)
    params2 = init_highway_params(kp2, SIZE2, LAYERS2)
    pw2, pb2, S2, Sp2 = prepare_highway_params(params2, dtype=jnp.bfloat16)
    out2 = jax.block_until_ready(
        highway_forward(x2, pw2, pb2, S2, Sp2, path="streamed"))
    ref2 = highway_reference(x2, params2, weight_dtype=jnp.bfloat16)
    err2 = float(jnp.max(jnp.abs(out2 - ref2)))
    assert err2 < 5e-3, f"streamed path mismatch vs reference, max abs err {err2}"

    # ---- Test 3: K-tiled weight streaming (v7x-style VMEM-constrained path) ----
    out3 = jax.block_until_ready(
        highway_forward(x2, pw2, pb2, S2, Sp2, path="streamed", k_tile=128))
    err3 = float(jnp.max(jnp.abs(out3 - ref2)))
    assert err3 < 5e-3, f"k-tiled path mismatch vs reference, max abs err {err3}"

    print("KERNEL_OK")
</pallas_src>

<mosaic_0001>
module attributes {stable_mosaic.version = 11 : i64} {
  func.func @kernel(%arg0: i32, %arg1: memref<8x128xf32, #tpu.memory_space<vmem>>, %arg2: memref<2x128x384xf32, #tpu.memory_space<vmem>>, %arg3: memref<2x1x384xf32, #tpu.memory_space<vmem>>, %arg4: memref<8x128xf32, #tpu.memory_space<vmem>>) attributes {dimension_semantics = [#tpu.dimension_semantics<parallel>], iteration_bounds = array<i64: 1>, scalar_prefetch = 0 : i64, scratch_operands = 0 : i64, tpu.core_type = #tpu.core_type<tc>, window_params = [{transform_indices = @transform_0, window_bounds = array<i64: 8, 128>}, {pipeline_mode = #tpu.pipeline_mode<synchronous>, transform_indices = @transform_1, window_bounds = array<i64: 2, 128, 384>}, {pipeline_mode = #tpu.pipeline_mode<synchronous>, transform_indices = @transform_2, window_bounds = array<i64: 2, 1, 384>}, {transform_indices = @transform_3, window_bounds = array<i64: 8, 128>}]} {
    %c0 = arith.constant 0 : index
    %c0_0 = arith.constant 0 : index
    %0 = vector.load %arg1[%c0, %c0_0] : memref<8x128xf32, #tpu.memory_space<vmem>>, vector<8x128xf32>
    %c0_1 = arith.constant 0 : index
    %c0_2 = arith.constant 0 : index
    %c0_3 = arith.constant 0 : index
    %1 = vector.load %arg2[%c0_1, %c0_2, %c0_3] : memref<2x128x384xf32, #tpu.memory_space<vmem>>, vector<1x128x384xf32>
    %2 = vector.shape_cast %1 : vector<1x128x384xf32> to vector<128x384xf32>
    %cst = arith.constant dense<0.000000e+00> : vector<8x384xf32>
    %3 = tpu.matmul %0, %2, %cst {dimension_numbers = #tpu.dot_dimension_numbers<[1], [0], [0], [1], [0, 0, 1, 1], [], []>} : vector<8x128xf32>, vector<128x384xf32>, vector<8x384xf32> -> vector<8x384xf32>
    %c0_4 = arith.constant 0 : index
    %c0_5 = arith.constant 0 : index
    %c0_6 = arith.constant 0 : index
    %4 = vector.load %arg3[%c0_4, %c0_5, %c0_6] : memref<2x1x384xf32, #tpu.memory_space<vmem>>, vector<1x1x384xf32>
    %5 = vector.shape_cast %4 : vector<1x1x384xf32> to vector<1x384xf32>
    %6 = vector.broadcast %5 : vector<1x384xf32> to vector<8x384xf32>
    %7 = arith.addf %3, %6 : vector<8x384xf32>
    %8 = vector.extract_strided_slice %7 {offsets = [0, 0], sizes = [8, 128], strides = [1, 1]} : vector<8x384xf32> to vector<8x128xf32>
    %9 = math.tanh %8 : vector<8x128xf32>
    %10 = vector.extract_strided_slice %7 {offsets = [0, 128], sizes = [8, 128], strides = [1, 1]} : vector<8x384xf32> to vector<8x128xf32>
    %11 = vector.extract_strided_slice %7 {offsets = [0, 256], sizes = [8, 128], strides = [1, 1]} : vector<8x384xf32> to vector<8x128xf32>
    %12 = arith.negf %11 : vector<8x128xf32>
    %13 = math.exp %12 : vector<8x128xf32>
    %cst_7 = arith.constant 1.000000e+00 : f32
    %14 = vector.broadcast %cst_7 : f32 to vector<8x128xf32>
    %15 = arith.addf %14, %13 : vector<8x128xf32>
    %16 = arith.divf %14, %15 : vector<8x128xf32>
    %17 = arith.subf %9, %10 : vector<8x128xf32>
    %18 = arith.mulf %16, %17 : vector<8x128xf32>
    %19 = arith.addf %10, %18 : vector<8x128xf32>
    %c1 = arith.constant 1 : index
    %c0_8 = arith.constant 0 : index
    %c0_9 = arith.constant 0 : index
    %20 = vector.load %arg2[%c1, %c0_8, %c0_9] : memref<2x128x384xf32, #tpu.memory_space<vmem>>, vector<1x128x384xf32>
    %21 = vector.shape_cast %20 : vector<1x128x384xf32> to vector<128x384xf32>
    %cst_10 = arith.constant dense<0.000000e+00> : vector<8x384xf32>
    %22 = tpu.matmul %19, %21, %cst_10 {dimension_numbers = #tpu.dot_dimension_numbers<[1], [0], [0], [1], [0, 0, 1, 1], [], []>} : vector<8x128xf32>, vector<128x384xf32>, vector<8x384xf32> -> vector<8x384xf32>
    %c1_11 = arith.constant 1 : index
    %c0_12 = arith.constant 0 : index
    %c0_13 = arith.constant 0 : index
    %23 = vector.load %arg3[%c1_11, %c0_12, %c0_13] : memref<2x1x384xf32, #tpu.memory_space<vmem>>, vector<1x1x384xf32>
    %24 = vector.shape_cast %23 : vector<1x1x384xf32> to vector<1x384xf32>
    %25 = vector.broadcast %24 : vector<1x384xf32> to vector<8x384xf32>
    %26 = arith.addf %22, %25 : vector<8x384xf32>
    %27 = vector.extract_strided_slice %26 {offsets = [0, 0], sizes = [8, 128], strides = [1, 1]} : vector<8x384xf32> to vector<8x128xf32>
    %28 = math.tanh %27 : vector<8x128xf32>
    %29 = vector.extract_strided_slice %26 {offsets = [0, 128], sizes = [8, 128], strides = [1, 1]} : vector<8x384xf32> to vector<8x128xf32>
    %30 = vector.extract_strided_slice %26 {offsets = [0, 256], sizes = [8, 128], strides = [1, 1]} : vector<8x384xf32> to vector<8x128xf32>
    %31 = arith.negf %30 : vector<8x128xf32>
    %32 = math.exp %31 : vector<8x128xf32>
    %cst_14 = arith.constant 1.000000e+00 : f32
    %33 = vector.broadcast %cst_14 : f32 to vector<8x128xf32>
    %34 = arith.addf %33, %32 : vector<8x128xf32>
    %35 = arith.divf %33, %34 : vector<8x128xf32>
    %36 = arith.subf %28, %29 : vector<8x128xf32>
    %37 = arith.mulf %35, %36 : vector<8x128xf32>
    %38 = arith.addf %29, %37 : vector<8x128xf32>
    %c0_15 = arith.constant 0 : index
    %c0_16 = arith.constant 0 : index
    %39 = vector.load %arg4[%c0_15, %c0_16] : memref<8x128xf32, #tpu.memory_space<vmem>>, vector<8x128xf32>
    tpu.vector_store %arg4[%c0_15, %c0_16], %38 {strides = array<i32>} : memref<8x128xf32, #tpu.memory_space<vmem>>, vector<8x128xf32>,
    return
  }
  func.func @transform_0(%arg0: i32) -> (i32, i32) {
    %c0_i32 = arith.constant 0 : i32
    %c0_i32_0 = arith.constant 0 : i32
    return %arg0, %c0_i32 : i32, i32
  }
  func.func @transform_1(%arg0: i32) -> (i32, i32, i32) {
    %c0_i32 = arith.constant 0 : i32
    %c0_i32_0 = arith.constant 0 : i32
    %c0_i32_1 = arith.constant 0 : i32
    %c0_i32_2 = arith.constant 0 : i32
    return %c0_i32, %c0_i32_0, %c0_i32_1 : i32, i32, i32
  }
  func.func @transform_2(%arg0: i32) -> (i32, i32, i32) {
    %c0_i32 = arith.constant 0 : i32
    %c0_i32_0 = arith.constant 0 : i32
    %c0_i32_1 = arith.constant 0 : i32
    %c0_i32_2 = arith.constant 0 : i32
    return %c0_i32, %c0_i32_0, %c0_i32_1 : i32, i32, i32
  }
  func.func @transform_3(%arg0: i32) -> (i32, i32) {
    %c0_i32 = arith.constant 0 : i32
    %c0_i32_0 = arith.constant 0 : i32
    return %arg0, %c0_i32 : i32, i32
  }
}

</mosaic_0001>

<llo_original>
// kernel: tpu_custom_call.1
$region0: #{tpu_custom_call.1}
  #allocation0 [shape = 'u32[]', space=smem, size = 0x4, offset = 0x4, fixed_abs, tag = 'smem constant byte address 0x4 - core index']
  #allocation1 [shape = 'u32[144,128]{1,0:T(1,128)}', space=vmem, size = 0x12000, scoped, tag = 'internal scratch']
  %s0 = inlined_call_operand.hbm [shape: f32[8,128], index: 0, kind: input, shape index: {}]
  %s1 = inlined_call_operand.hbm [shape: f32[2,128,384], index: 1, kind: input, shape index: {}]
  %s2 = inlined_call_operand.vmem [shape: f32[2,1,384], index: 2, kind: input, shape index: {}]
  %s3 = inlined_call_operand.hbm [shape: f32[8,128], index: 3, kind: output, shape index: {}]
  %s4 = sld [smem:[#allocation0]]
  $region30: #{tpu_custom_call.1} parent=0
    _
  %s6 = ssub.s32 1, %s4
  %s7 = scalar_select 0, %s6, %s4
  $region1: #{tpu_custom_call.1} parent=0
    #allocation2 [shape = 'u8[4096]{0}', space=vmem, size = 0x1000, scoped, tag = 'input window, operand 0, single buffered']
    #allocation3 [shape = 's32[1]{0}', space=sflag, size = 0x4, scoped, tag = 'scoped memory for tpu_custom_call.1']
    #allocation4 [shape = 's32[1]{0}', space=sflag, size = 0x4, scoped, tag = 'scoped memory for tpu_custom_call.1']
    #allocation5 [shape = 'u8[393216]{0}', space=vmem, size = 0x60000, scoped, tag = 'input window, operand 1, single buffered']
    #allocation6 [shape = 's32[1]{0}', space=sflag, size = 0x4, scoped, tag = 'scoped memory for tpu_custom_call.1']
    #allocation7 [shape = 'u8[4096]{0}', space=vmem, size = 0x1000, scoped, tag = 'output window, operand 0, single buffered']
    %8 = vsyncpa [#allocation3], 0
    %9 = vsyncpa [#allocation6], 0
    %10 = vsyncpa [#allocation4], 0
    // Predicated region
    $region2: #{tpu_custom_call.1} parent=1 // pred_check
      _
    $region3: #{tpu_custom_call.1} parent=1 // pred_check_branch
      %12 = sbr.rel (0) target = $region5
    $region4: #{tpu_custom_call.1} parent=1 // pred_region
      %s14 = ssub.s32 128, 128
      %15 = vsyncadd [#allocation3], %s14
      %s17 = sshll.u32 [#allocation2], 4
      %s18 = int_to_ptr.vmem [resolvable:$true] %s17
      %20 = dma.hbm_to_vmem [thread:$0]  %s0, 128, %s18, [#allocation3]
    $region5: #{tpu_custom_call.1} parent=1 // pred_fallthru
      _
    // Predicated region
    $region6: #{tpu_custom_call.1} parent=1 // pred_check
      _
    $region7: #{tpu_custom_call.1} parent=1 // pred_check_branch
      %22 = sbr.rel (0) target = $region9
    $region8: #{tpu_custom_call.1} parent=1 // pred_region
      %s24 = ssub.s32 12288, 12288
      %25 = vsyncadd [#allocation6], %s24
      %s26 = sshll.u32 [#allocation5], 4
      %s27 = int_to_ptr.vmem [resolvable:$true] %s26
      %32 = dma.hbm_to_vmem [thread:$0]  %s1, 12288, %s27, [#allocation6], 384, 384, 24
    $region9: #{tpu_custom_call.1} parent=1 // pred_fallthru
      _
    // Predicated region
    $region10: #{tpu_custom_call.1} parent=1 // pred_check
      _
    $region11: #{tpu_custom_call.1} parent=1 // pred_check_branch
      %34 = sbr.rel (0) target = $region13
    $region12: #{tpu_custom_call.1} parent=1 // pred_region
      _
    $region13: #{tpu_custom_call.1} parent=1 // pred_fallthru
      _
    // Predicated region
    $region14: #{tpu_custom_call.1} parent=1 // pred_check
      _
    $region15: #{tpu_custom_call.1} parent=1 // pred_check_branch
      %36 = sbr.rel (0) target = $region17
    $region16: #{tpu_custom_call.1} parent=1 // pred_region
      %37 = dma.done [#allocation3], 128
    $region17: #{tpu_custom_call.1} parent=1 // pred_fallthru
      _
    // Predicated region
    $region18: #{tpu_custom_call.1} parent=1 // pred_check
      _
    $region19: #{tpu_custom_call.1} parent=1 // pred_check_branch
      %39 = sbr.rel (0) target = $region21
    $region20: #{tpu_custom_call.1} parent=1 // pred_region
      %40 = dma.done [#allocation6], 12288
    $region21: #{tpu_custom_call.1} parent=1 // pred_fallthru
      _
    %v41 = vld [vmem:[#allocation2] sm:$0xff]
    %v42 = vld [vmem:[#allocation5] sm:$0xff]
    %v43 = vld [vmem:[#allocation5 + $0x8] sm:$0xff]
    %v44 = vld [vmem:[#allocation5 + $0x10] sm:$0xff]
    %v45 = vld [vmem:[#allocation5 + $0x18] sm:$0xff]
    %v46 = vld [vmem:[#allocation5 + $0x20] sm:$0xff]
    %v47 = vld [vmem:[#allocation5 + $0x28] sm:$0xff]
    %v48 = vld [vmem:[#allocation5 + $0x30] sm:$0xff]
    %v49 = vld [vmem:[#allocation5 + $0x38] sm:$0xff]
    %v50 = vld [vmem:[#allocation5 + $0x40] sm:$0xff]
    %v51 = vld [vmem:[#allocation5 + $0x48] sm:$0xff]
    %v52 = vld [vmem:[#allocation5 + $0x50] sm:$0xff]
    %v53 = vld [vmem:[#allocation5 + $0x58] sm:$0xff]
    %v54 = vld [vmem:[#allocation5 + $0x60] sm:$0xff]
    %v55 = vld [vmem:[#allocation5 + $0x68] sm:$0xff]
    %v56 = vld [vmem:[#allocation5 + $0x70] sm:$0xff]
    %v57 = vld [vmem:[#allocation5 + $0x78] sm:$0xff]
    %v58 = vld [vmem:[#allocation5 + $0x80] sm:$0xff]
    %v59 = vld [vmem:[#allocation5 + $0x88] sm:$0xff]
    %v60 = vld [vmem:[#allocation5 + $0x90] sm:$0xff]
    %v61 = vld [vmem:[#allocation5 + $0x98] sm:$0xff]
    %v62 = vld [vmem:[#allocation5 + $0xa0] sm:$0xff]
    %v63 = vld [vmem:[#allocation5 + $0xa8] sm:$0xff]
    %v64 = vld [vmem:[#allocation5 + $0xb0] sm:$0xff]
    %v65 = vld [vmem:[#allocation5 + $0xb8] sm:$0xff]
    %v66 = vld [vmem:[#allocation5 + $0xc0] sm:$0xff]
    %v67 = vld [vmem:[#allocation5 + $0xc8] sm:$0xff]
    %v68 = vld [vmem:[#allocation5 + $0xd0] sm:$0xff]
    %v69 = vld [vmem:[#allocation5 + $0xd8] sm:$0xff]
    %v70 = vld [vmem:[#allocation5 + $0xe0] sm:$0xff]
    %v71 = vld [vmem:[#allocation5 + $0xe8] sm:$0xff]
    %v72 = vld [vmem:[#allocation5 + $0xf0] sm:$0xff]
    %v73 = vld [vmem:[#allocation5 + $0xf8] sm:$0xff]
    %v74 = vld [vmem:[#allocation5 + $0x100] sm:$0xff]
    %v75 = vld [vmem:[#allocation5 + $0x108] sm:$0xff]
    %v76 = vld [vmem:[#allocation5 + $0x110] sm:$0xff]
    %v77 = vld [vmem:[#allocation5 + $0x118] sm:$0xff]
    %v78 = vld [vmem:[#allocation5 + $0x120] sm:$0xff]
    %v79 = vld [vmem:[#allocation5 + $0x128] sm:$0xff]
    %v80 = vld [vmem:[#allocation5 + $0x130] sm:$0xff]
    %v81 = vld [vmem:[#allocation5 + $0x138] sm:$0xff]
    %v82 = vld [vmem:[#allocation5 + $0x140] sm:$0xff]
    %v83 = vld [vmem:[#allocation5 + $0x148] sm:$0xff]
    %v84 = vld [vmem:[#allocation5 + $0x150] sm:$0xff]
    %v85 = vld [vmem:[#allocation5 + $0x158] sm:$0xff]
    %v86 = vld [vmem:[#allocation5 + $0x160] sm:$0xff]
    %v87 = vld [vmem:[#allocation5 + $0x168] sm:$0xff]
    %v88 = vld [vmem:[#allocation5 + $0x170] sm:$0xff]
    %v89 = vld [vmem:[#allocation5 + $0x178] sm:$0xff]
    %v90 = vld [vmem:[%s2] sm:$0x7]
    %v92 = vlaneseq
    %v93 = vshrl.u32 %v92, 7
    %v94 = vsub.s32 0, %v93
    %v95 = vrot.slane %v90, %v94
    %v96 = vlaneseq
    %v97 = vshrl.u32 %v96, 7
    %v98 = vsub.s32 1, %v97
    %v99 = vrot.slane %v90, %v98
    %v100 = vlaneseq
    %v101 = vshrl.u32 %v100, 7
    %v102 = vsub.s32 2, %v101
    %v103 = vrot.slane %v90, %v102
    %107 = vmatprep.subr.mxu0 %v43
    %108 = vmatpush1.msra.mxu0 %v42
    %109 = vmatprep.subr.mxu0 %v46
    %110 = vmatpush1.msra.mxu0 %v45
    %111 = vmatprep.subr.mxu0 %v49
    %112 = vmatpush1.msra.mxu0 %v48
    %113 = vmatprep.subr.mxu0 %v52
    %114 = vmatpush1.msra.mxu0 %v51
    %115 = vmatprep.subr.mxu0 %v55
    %116 = vmatpush1.msra.mxu0 %v54
    %117 = vmatprep.subr.mxu0 %v58
    %118 = vmatpush1.msra.mxu0 %v57
    %119 = vmatprep.subr.mxu0 %v61
    %120 = vmatpush1.msra.mxu0 %v60
    %121 = vmatprep.subr.mxu0 %v64
    %122 = vmatpush1.msra.mxu0 %v63
    %123 = vmatprep.subr.mxu0 %v67
    %124 = vmatpush1.msra.mxu0 %v66
    %125 = vmatprep.subr.mxu0 %v70
    %126 = vmatpush1.msra.mxu0 %v69
    %127 = vmatprep.subr.mxu0 %v73
    %128 = vmatpush1.msra.mxu0 %v72
    %129 = vmatprep.subr.mxu0 %v76
    %130 = vmatpush1.msra.mxu0 %v75
    %131 = vmatprep.subr.mxu0 %v79
    %132 = vmatpush1.msra.mxu0 %v78
    %133 = vmatprep.subr.mxu0 %v82
    %134 = vmatpush1.msra.mxu0 %v81
    %135 = vmatprep.subr.mxu0 %v85
    %136 = vmatpush1.msra.mxu0 %v84
    %137 = vmatprep.subr.mxu0 %v88
    %138 = vmatpush1.msra.mxu0 %v87
    %139 = vmatprep.subr.mxu0 0.0
    %140 = vmatpush1.msra.mxu0 0.0
    %141 = vmatprep.subr.mxu0 0.0
    %142 = vmatpush1.msra.mxu0 0.0
    %143 = vmatprep.subr.mxu0 0.0
    %144 = vmatpush1.msra.mxu0 0.0
    %145 = vmatprep.subr.mxu0 0.0
    %146 = vmatpush1.msra.mxu0 0.0
    %147 = vmatprep.subr.mxu0 0.0
    %148 = vmatpush1.msra.mxu0 0.0
    %149 = vmatprep.subr.mxu0 0.0
    %150 = vmatpush1.msra.mxu0 0.0
    %151 = vmatprep.subr.mxu0 0.0
    %152 = vmatpush1.msra.mxu0 0.0
    %153 = vmatprep.subr.mxu0 0.0
    %154 = vmatpush1.msra.mxu0 0.0
    %155 = vmatprep.subr.mxu0 0.0
    %156 = vmatpush1.msra.mxu0 0.0
    %157 = vmatprep.subr.mxu0 0.0
    %158 = vmatpush1.msra.mxu0 0.0
    %159 = vmatprep.subr.mxu0 0.0
    %160 = vmatpush1.msra.mxu0 0.0
    %161 = vmatprep.subr.mxu0 0.0
    %162 = vmatpush1.msra.mxu0 0.0
    %163 = vmatprep.subr.mxu0 0.0
    %164 = vmatpush1.msra.mxu0 0.0
    %165 = vmatprep.subr.mxu0 0.0
    %166 = vmatpush1.msra.mxu0 0.0
    %167 = vmatprep.subr.mxu0 0.0
    %168 = vmatpush1.msra.mxu0 0.0
    %169 = vmatprep.subr.mxu0 0.0
    %170 = vmatpush1.msra.mxu0 0.0
    %171 = vmatprep.mubr.f32.mxu0 0.0
    %172 = vmatmul.mubr.f32.gmra.mrb[0].mxu0 %v41
    %v173 = vpop.f32.mrb[0].mxu0
    %v174 = vadd.f32 %v95, %v173
    %v175 = vpop.f32.mrb[0].mxu0
    %v176 = vadd.f32 %v99, %v175
    %177 = vdwg.mxu0
    %178 = vmatprep.subr.mxu0 0.0
    %179 = vmatpush1.msra.mxu0 %v44
    %180 = vmatprep.subr.mxu0 0.0
    %181 = vmatpush1.msra.mxu0 %v47
    %182 = vmatprep.subr.mxu0 0.0
    %183 = vmatpush1.msra.mxu0 %v50
    %184 = vmatprep.subr.mxu0 0.0
    %185 = vmatpush1.msra.mxu0 %v53
    %186 = vmatprep.subr.mxu0 0.0
    %187 = vmatpush1.msra.mxu0 %v56
    %188 = vmatprep.subr.mxu0 0.0
    %189 = vmatpush1.msra.mxu0 %v59
    %190 = vmatprep.subr.mxu0 0.0
    %191 = vmatpush1.msra.mxu0 %v62
    %192 = vmatprep.subr.mxu0 0.0
    %193 = vmatpush1.msra.mxu0 %v65
    %194 = vmatprep.subr.mxu0 0.0
    %195 = vmatpush1.msra.mxu0 %v68
    %196 = vmatprep.subr.mxu0 0.0
    %197 = vmatpush1.msra.mxu0 %v71
    %198 = vmatprep.subr.mxu0 0.0
    %199 = vmatpush1.msra.mxu0 %v74
    %200 = vmatprep.subr.mxu0 0.0
    %201 = vmatpush1.msra.mxu0 %v77
    %202 = vmatprep.subr.mxu0 0.0
    %203 = vmatpush1.msra.mxu0 %v80
    %204 = vmatprep.subr.mxu0 0.0
    %205 = vmatpush1.msra.mxu0 %v83
    %206 = vmatprep.subr.mxu0 0.0
    %207 = vmatpush1.msra.mxu0 %v86
    %208 = vmatprep.subr.mxu0 0.0
    %209 = vmatpush1.msra.mxu0 %v89
    %210 = vmatprep.subr.mxu0 0.0
    %211 = vmatpush1.msra.mxu0 0.0
    %212 = vmatprep.subr.mxu0 0.0
    %213 = vmatpush1.msra.mxu0 0.0
    %214 = vmatprep.subr.mxu0 0.0
    %215 = vmatpush1.msra.mxu0 0.0
    %216 = vmatprep.subr.mxu0 0.0
    %217 = vmatpush1.msra.mxu0 0.0
    %218 = vmatprep.subr.mxu0 0.0
    %219 = vmatpush1.msra.mxu0 0.0
    %220 = vmatprep.subr.mxu0 0.0
    %221 = vmatpush1.msra.mxu0 0.0
    %222 = vmatprep.subr.mxu0 0.0
    %223 = vmatpush1.msra.mxu0 0.0
    %224 = vmatprep.subr.mxu0 0.0
    %225 = vmatpush1.msra.mxu0 0.0
    %226 = vmatprep.subr.mxu0 0.0
    %227 = vmatpush1.msra.mxu0 0.0
    %228 = vmatprep.subr.mxu0 0.0
    %229 = vmatpush1.msra.mxu0 0.0
    %230 = vmatprep.subr.mxu0 0.0
    %231 = vmatpush1.msra.mxu0 0.0
    %232 = vmatprep.subr.mxu0 0.0
    %233 = vmatpush1.msra.mxu0 0.0
    %234 = vmatprep.subr.mxu0 0.0
    %235 = vmatpush1.msra.mxu0 0.0
    %236 = vmatprep.subr.mxu0 0.0
    %237 = vmatpush1.msra.mxu0 0.0
    %238 = vmatprep.subr.mxu0 0.0
    %239 = vmatpush1.msra.mxu0 0.0
    %240 = vmatprep.subr.mxu0 0.0
    %241 = vmatpush1.msra.mxu0 0.0
    %242 = vmatprep.mubr.f32.mxu0 0.0
    %243 = vmatmul.mubr.f32.gmra.mrb[0].mxu0 %v41
    %v244 = vpop.f32.mrb[0].mxu0
    %v245 = vadd.f32 %v103, %v244
    %v246 = vpop.f32.mrb[0].mxu0
    %247 = vdwg.mxu0
    %v248 = vtanh.pop %v174
    %v249 = vxor.u32 %v245, 2147483648
    %v250 = vmul.f32 %v249, 1.442695
    %v251 = vpow.pop %v250
    %v252 = vadd.f32 %v251, 1.0
    %v253 = vrcp.pop %v252
    %v254 = vmul.f32 1.0, %v253
    %v255 = vsub.f32 %v248, %v176
    %v256 = vmul.f32 %v254, %v255
    %v257 = vadd.f32 %v176, %v256
    %s258 = scalar_lea.vmem [#allocation5], 384
    %v259 = vld [vmem:[%s258] sm:$0xff]
    %v260 = vld [vmem:[%s258 + $0x8] sm:$0xff]
    %v261 = vld [vmem:[%s258 + $0x10] sm:$0xff]
    %v262 = vld [vmem:[%s258 + $0x18] sm:$0xff]
    %v263 = vld [vmem:[%s258 + $0x20] sm:$0xff]
    %v264 = vld [vmem:[%s258 + $0x28] sm:$0xff]
    %v265 = vld [vmem:[%s258 + $0x30] sm:$0xff]
    %v266 = vld [vmem:[%s258 + $0x38] sm:$0xff]
    %v267 = vld [vmem:[%s258 + $0x40] sm:$0xff]
    %v268 = vld [vmem:[%s258 + $0x48] sm:$0xff]
    %v269 = vld [vmem:[%s258 + $0x50] sm:$0xff]
    %v270 = vld [vmem:[%s258 + $0x58] sm:$0xff]
    %v271 = vld [vmem:[%s258 + $0x60] sm:$0xff]
    %v272 = vld [vmem:[%s258 + $0x68] sm:$0xff]
    %v273 = vld [vmem:[%s258 + $0x70] sm:$0xff]
    %v274 = vld [vmem:[%s258 + $0x78] sm:$0xff]
    %v275 = vld [vmem:[%s258 + $0x80] sm:$0xff]
    %v276 = vld [vmem:[%s258 + $0x88] sm:$0xff]
    %v277 = vld [vmem:[%s258 + $0x90] sm:$0xff]
    %v278 = vld [vmem:[%s258 + $0x98] sm:$0xff]
    %v279 = vld [vmem:[%s258 + $0xa0] sm:$0xff]
    %v280 = vld [vmem:[%s258 + $0xa8] sm:$0xff]
    %v281 = vld [vmem:[%s258 + $0xb0] sm:$0xff]
    %v282 = vld [vmem:[%s258 + $0xb8] sm:$0xff]
    %v283 = vld [vmem:[%s258 + $0xc0] sm:$0xff]
    %v284 = vld [vmem:[%s258 + $0xc8] sm:$0xff]
    %v285 = vld [vmem:[%s258 + $0xd0] sm:$0xff]
    %v286 = vld [vmem:[%s258 + $0xd8] sm:$0xff]
    %v287 = vld [vmem:[%s258 + $0xe0] sm:$0xff]
    %v288 = vld [vmem:[%s258 + $0xe8] sm:$0xff]
    %v289 = vld [vmem:[%s258 + $0xf0] sm:$0xff]
    %v290 = vld [vmem:[%s258 + $0xf8] sm:$0xff]
    %v291 = vld [vmem:[%s258 + $0x100] sm:$0xff]
    %v292 = vld [vmem:[%s258 + $0x108] sm:$0xff]
    %v293 = vld [vmem:[%s258 + $0x110] sm:$0xff]
    %v294 = vld [vmem:[%s258 + $0x118] sm:$0xff]
    %v295 = vld [vmem:[%s258 + $0x120] sm:$0xff]
    %v296 = vld [vmem:[%s258 + $0x128] sm:$0xff]
    %v297 = vld [vmem:[%s258 + $0x130] sm:$0xff]
    %v298 = vld [vmem:[%s258 + $0x138] sm:$0xff]
    %v299 = vld [vmem:[%s258 + $0x140] sm:$0xff]
    %v300 = vld [vmem:[%s258 + $0x148] sm:$0xff]
    %v301 = vld [vmem:[%s258 + $0x150] sm:$0xff]
    %v302 = vld [vmem:[%s258 + $0x158] sm:$0xff]
    %v303 = vld [vmem:[%s258 + $0x160] sm:$0xff]
    %v304 = vld [vmem:[%s258 + $0x168] sm:$0xff]
    %v305 = vld [vmem:[%s258 + $0x170] sm:$0xff]
    %v306 = vld [vmem:[%s258 + $0x178] sm:$0xff]
    %s307 = scalar_lea.vmem %s2, 3
    %v308 = vld [vmem:[%s307] sm:$0x7]
    %v310 = vlaneseq
    %v311 = vshrl.u32 %v310, 7
    %v312 = vsub.s32 0, %v311
    %v313 = vrot.slane %v308, %v312
    %v314 = vlaneseq
    %v315 = vshrl.u32 %v314, 7
    %v316 = vsub.s32 1, %v315
    %v317 = vrot.slane %v308, %v316
    %v318 = vlaneseq
    %v319 = vshrl.u32 %v318, 7
    %v320 = vsub.s32 2, %v319
    %v321 = vrot.slane %v308, %v320
    %325 = vmatprep.subr.mxu0 %v260
    %326 = vmatpush1.msra.mxu0 %v259
    %327 = vmatprep.subr.mxu0 %v263
    %328 = vmatpush1.msra.mxu0 %v262
    %329 = vmatprep.subr.mxu0 %v266
    %330 = vmatpush1.msra.mxu0 %v265
    %331 = vmatprep.subr.mxu0 %v269
    %332 = vmatpush1.msra.mxu0 %v268
    %333 = vmatprep.subr.mxu0 %v272
    %334 = vmatpush1.msra.mxu0 %v271
    %335 = vmatprep.subr.mxu0 %v275
    %336 = vmatpush1.msra.mxu0 %v274
    %337 = vmatprep.subr.mxu0 %v278
    %338 = vmatpush1.msra.mxu0 %v277
    %339 = vmatprep.subr.mxu0 %v281
    %340 = vmatpush1.msra.mxu0 %v280
    %341 = vmatprep.subr.mxu0 %v284
    %342 = vmatpush1.msra.mxu0 %v283
    %343 = vmatprep.subr.mxu0 %v287
    %344 = vmatpush1.msra.mxu0 %v286
    %345 = vmatprep.subr.mxu0 %v290
    %346 = vmatpush1.msra.mxu0 %v289
    %347 = vmatprep.subr.mxu0 %v293
    %348 = vmatpush1.msra.mxu0 %v292
    %349 = vmatprep.subr.mxu0 %v296
    %350 = vmatpush1.msra.mxu0 %v295
    %351 = vmatprep.subr.mxu0 %v299
    %352 = vmatpush1.msra.mxu0 %v298
    %353 = vmatprep.subr.mxu0 %v302
    %354 = vmatpush1.msra.mxu0 %v301
    %355 = vmatprep.subr.mxu0 %v305
    %356 = vmatpush1.msra.mxu0 %v304
    %357 = vmatprep.subr.mxu0 0.0
    %358 = vmatpush1.msra.mxu0 0.0
    %359 = vmatprep.subr.mxu0 0.0
    %360 = vmatpush1.msra.mxu0 0.0
    %361 = vmatprep.subr.mxu0 0.0
    %362 = vmatpush1.msra.mxu0 0.0
    %363 = vmatprep.subr.mxu0 0.0
    %364 = vmatpush1.msra.mxu0 0.0
    %365 = vmatprep.subr.mxu0 0.0
    %366 = vmatpush1.msra.mxu0 0.0
    %367 = vmatprep.subr.mxu0 0.0
    %368 = vmatpush1.msra.mxu0 0.0
    %369 = vmatprep.subr.mxu0 0.0
    %370 = vmatpush1.msra.mxu0 0.0
    %371 = vmatprep.subr.mxu0 0.0
    %372 = vmatpush1.msra.mxu0 0.0
    %373 = vmatprep.subr.mxu0 0.0
    %374 = vmatpush1.msra.mxu0 0.0
    %375 = vmatprep.subr.mxu0 0.0
    %376 = vmatpush1.msra.mxu0 0.0
    %377 = vmatprep.subr.mxu0 0.0
    %378 = vmatpush1.msra.mxu0 0.0
    %379 = vmatprep.subr.mxu0 0.0
    %380 = vmatpush1.msra.mxu0 0.0
    %381 = vmatprep.subr.mxu0 0.0
    %382 = vmatpush1.msra.mxu0 0.0
    %383 = vmatprep.subr.mxu0 0.0
    %384 = vmatpush1.msra.mxu0 0.0
    %385 = vmatprep.subr.mxu0 0.0
    %386 = vmatpush1.msra.mxu0 0.0
    %387 = vmatprep.subr.mxu0 0.0
    %388 = vmatpush1.msra.mxu0 0.0
    %389 = vmatprep.mubr.f32.mxu0 0.0
    %390 = vmatmul.mubr.f32.gmra.mrb[0].mxu0 %v257
    %v391 = vpop.f32.mrb[0].mxu0
    %v392 = vadd.f32 %v313, %v391
    %v393 = vpop.f32.mrb[0].mxu0
    %v394 = vadd.f32 %v317, %v393
    %395 = vdwg.mxu0
    %396 = vmatprep.subr.mxu0 0.0
    %397 = vmatpush1.msra.mxu0 %v261
    %398 = vmatprep.subr.mxu0 0.0
    %399 = vmatpush1.msra.mxu0 %v264
    %400 = vmatprep.subr.mxu0 0.0
    %401 = vmatpush1.msra.mxu0 %v267
    %402 = vmatprep.subr.mxu0 0.0
    %403 = vmatpush1.msra.mxu0 %v270
    %404 = vmatprep.subr.mxu0 0.0
    %405 = vmatpush1.msra.mxu0 %v273
    %406 = vmatprep.subr.mxu0 0.0
    %407 = vmatpush1.msra.mxu0 %v276
    %408 = vmatprep.subr.mxu0 0.0
    %409 = vmatpush1.msra.mxu0 %v279
    %410 = vmatprep.subr.mxu0 0.0
    %411 = vmatpush1.msra.mxu0 %v282
    %412 = vmatprep.subr.mxu0 0.0
    %413 = vmatpush1.msra.mxu0 %v285
    %414 = vmatprep.subr.mxu0 0.0
    %415 = vmatpush1.msra.mxu0 %v288
    %416 = vmatprep.subr.mxu0 0.0
    %417 = vmatpush1.msra.mxu0 %v291
    %418 = vmatprep.subr.mxu0 0.0
    %419 = vmatpush1.msra.mxu0 %v294
    %420 = vmatprep.subr.mxu0 0.0
    %421 = vmatpush1.msra.mxu0 %v297
    %422 = vmatprep.subr.mxu0 0.0
    %423 = vmatpush1.msra.mxu0 %v300
    %424 = vmatprep.subr.mxu0 0.0
    %425 = vmatpush1.msra.mxu0 %v303
    %426 = vmatprep.subr.mxu0 0.0
    %427 = vmatpush1.msra.mxu0 %v306
    %428 = vmatprep.subr.mxu0 0.0
    %429 = vmatpush1.msra.mxu0 0.0
    %430 = vmatprep.subr.mxu0 0.0
    %431 = vmatpush1.msra.mxu0 0.0
    %432 = vmatprep.subr.mxu0 0.0
    %433 = vmatpush1.msra.mxu0 0.0
    %434 = vmatprep.subr.mxu0 0.0
    %435 = vmatpush1.msra.mxu0 0.0
    %436 = vmatprep.subr.mxu0 0.0
    %437 = vmatpush1.msra.mxu0 0.0
    %438 = vmatprep.subr.mxu0 0.0
    %439 = vmatpush1.msra.mxu0 0.0
    %440 = vmatprep.subr.mxu0 0.0
    %441 = vmatpush1.msra.mxu0 0.0
    %442 = vmatprep.subr.mxu0 0.0
    %443 = vmatpush1.msra.mxu0 0.0
    %444 = vmatprep.subr.mxu0 0.0
    %445 = vmatpush1.msra.mxu0 0.0
    %446 = vmatprep.subr.mxu0 0.0
    %447 = vmatpush1.msra.mxu0 0.0
    %448 = vmatprep.subr.mxu0 0.0
    %449 = vmatpush1.msra.mxu0 0.0
    %450 = vmatprep.subr.mxu0 0.0
    %451 = vmatpush1.msra.mxu0 0.0
    %452 = vmatprep.subr.mxu0 0.0
    %453 = vmatpush1.msra.mxu0 0.0
    %454 = vmatprep.subr.mxu0 0.0
    %455 = vmatpush1.msra.mxu0 0.0
    %456 = vmatprep.subr.mxu0 0.0
    %457 = vmatpush1.msra.mxu0 0.0
    %458 = vmatprep.subr.mxu0 0.0
    %459 = vmatpush1.msra.mxu0 0.0
    %460 = vmatprep.mubr.f32.mxu0 0.0
    %461 = vmatmul.mubr.f32.gmra.mrb[0].mxu0 %v257
    %v462 = vpop.f32.mrb[0].mxu0
    %v463 = vadd.f32 %v321, %v462
    %v464 = vpop.f32.mrb[0].mxu0
    %465 = vdwg.mxu0
    %v466 = vtanh.pop %v392
    %v467 = vxor.u32 %v463, 2147483648
    %v468 = vmul.f32 %v467, 1.442695
    %v469 = vpow.pop %v468
    %v470 = vadd.f32 %v469, 1.0
    %v471 = vrcp.pop %v470
    %v472 = vmul.f32 1.0, %v471
    %v473 = vsub.f32 %v466, %v394
    %v474 = vmul.f32 %v472, %v473
    %v475 = vadd.f32 %v394, %v474
    %476 = vst [vmem:[#allocation7] sm:$0xff] %v475
    // Predicated region
    $region22: #{tpu_custom_call.1} parent=1 // pred_check
      _
    $region23: #{tpu_custom_call.1} parent=1 // pred_check_branch
      %478 = sbr.rel (0) target = $region25
    $region24: #{tpu_custom_call.1} parent=1 // pred_region
      %s480 = ssub.s32 128, 128
      %481 = vsyncadd [#allocation4], %s480
      %s483 = sshll.u32 [#allocation7], 4
      %s484 = int_to_ptr.vmem [resolvable:$true] %s483
      %486 = dma.vmem_to_hbm [thread:$0]  %s484, 128, %s3, [#allocation4]
    $region25: #{tpu_custom_call.1} parent=1 // pred_fallthru
      _
    // Predicated region
    $region26: #{tpu_custom_call.1} parent=1 // pred_check
      _
    $region27: #{tpu_custom_call.1} parent=1 // pred_check_branch
      %488 = sbr.rel (0) target = $region29
    $region28: #{tpu_custom_call.1} parent=1 // pred_region
      %489 = dma.done [#allocation4], 128
    $region29: #{tpu_custom_call.1} parent=1 // pred_fallthru
      _
    %490 = vsyncpa [#allocation3], 1
    %491 = vsyncpa [#allocation6], 1
    %492 = vsyncpa [#allocation4], 1

</llo_original>
